<compile_context>
chip_gen: v5e
topology: v5e:2x2
jax: 0.10.0
libtpu: 0.0.40
codegen_flags: <defaults>
</compile_context>

<pallas_src>
import jax
import jax.numpy as jnp
from jax.experimental import pallas as pl
from jax.experimental.pallas import tpu as pltpu


def _round_up(x, m):
    return ((x + m - 1) // m) * m


def _vmem_capacity_bytes():
    try:
        return int(pltpu.get_tpu_info().vmem_capacity_bytes)
    except Exception:
        return 64 * 1024 * 1024  # conservative fallback (v7x per-TC VMEM)


def _resident_spec(shape, index_map):
    """BlockSpec for a block whose index_map is constant across the grid: one buffer only."""
    if hasattr(pl, "Buffered"):
        try:
            return pl.BlockSpec(shape, index_map, pipeline_mode=pl.Buffered(1))
        except TypeError:
            pass
    return pl.BlockSpec(shape, index_map)


def folded_mlp_kernel(x_ref, w_ref, b_ref, o_ref, acc_ref):
    """One (batch-tile, K-tile) step of  out = x @ W + b  (folded affine map).

    x_ref  : (TM, TK)  bf16 activations tile
    w_ref  : (TK, NP)  bf16 folded weight tile, (K, N)-oriented -> natural MXU feed,
                       lane-dense (TM, NP) result
    b_ref  : (1,  NP)  f32 folded bias (VMEM-resident)
    o_ref  : (TM, NP)  f32 output tile (lane-dense, unmasked stores since NP % 128 == 0)
    acc_ref: (TM, NP)  f32 accumulator scratch across the K grid axis
    """
    k = pl.program_id(1)

    @pl.when(k == 0)
    def _():
        acc_ref[...] = jnp.zeros_like(acc_ref)

    acc_ref[...] += jnp.dot(x_ref[...], w_ref[...],
                            preferred_element_type=jnp.float32)

    @pl.when(k == pl.num_programs(1) - 1)
    def _():
        o_ref[...] = (acc_ref[...] + b_ref[...]).astype(o_ref.dtype)


def _choose_tile_k(insize, n_pad, vmem_cap):
    """Whole-K weight residency when it fits comfortably; otherwise a 128-multiple K tile."""
    resident_limit = min(24 << 20, vmem_cap // 4)
    if insize * n_pad * 2 <= resident_limit:     # bf16 weight, single buffer
        return insize, 1                         # tk == full K, 1 weight buffer
    per_block_rows = max(1, (resident_limit // 2) // (n_pad * 2))
    tk = max(128, (per_block_rows // 128) * 128)
    return tk, 2                                 # K-tiled weight needs double buffering


def _choose_tile_m(batch, tk, n_pad, weight_bytes, vmem_cap):
    """Batch tile: multiple of 128 (256-512 preferred) chosen against a VMEM budget;
    8-row granularity only for tiny batches."""
    if batch < 128:
        return max(8, _round_up(batch, 8))
    budget = max(16 << 20, vmem_cap - (16 << 20))
    cap = _round_up(batch, 128)
    for tm in (512, 384, 256, 128):
        tm = min(tm, cap)
        need = (2 * tm * tk * 2          # double-buffered bf16 x tiles
                + 2 * tm * n_pad * 4     # double-buffered f32 out tiles
                + tm * n_pad * 4         # f32 accumulator scratch
                + weight_bytes           # resident / buffered weight
                + n_pad * 4)             # bias
        if need <= budget:
            return tm
    return 128


def make_mlp_forward(w1, b1, w2, b2, w3, b3):
    """Fold the three affine layers ONCE (hoisted out of the per-call path), pad/cast for
    the TPU kernel, and return a jitted forward(x) matching MLP.forward (incl. .squeeze()).

    wK are passed pre-transposed as (in_features, out_features); bK as (1, out_features)."""
    # One-time algebraic fold, in f32.
    # TODO(synk): for very wide hidden layers, do this one-time fold in float64 on host.
    w = (w1 @ w2) @ w3                               # (insize, outsize)
    b = b1 @ w2 @ w3 + b2 @ w3 + b3                  # (1, outsize)
    insize, outsize = w.shape

    n_pad = _round_up(outsize, 128)                  # lane-dense output -> unmasked vst
    vmem_cap = _vmem_capacity_bytes()
    tk, w_buffers = _choose_tile_k(insize, n_pad, vmem_cap)
    k_pad = _round_up(insize, tk)

    # Zero-padded, (K, N)-oriented, bf16 weight (MXU feed); bias stays f32.
    w_kn = jnp.zeros((k_pad, n_pad), jnp.float32).at[:insize, :outsize].set(w)
    w_kn = w_kn.astype(jnp.bfloat16)
    b_n = jnp.zeros((1, n_pad), jnp.float32).at[:, :outsize].set(b)

    @jax.jit
    def forward(x):
        batch = x.shape[0]
        xb = x.astype(jnp.bfloat16)                  # bf16 halves HBM traffic for streamed x
        if k_pad != insize:
            xb = jnp.pad(xb, ((0, 0), (0, k_pad - insize)))

        weight_bytes = w_buffers * tk * n_pad * 2
        tm = _choose_tile_m(batch, tk, n_pad, weight_bytes, vmem_cap)
        nm = pl.cdiv(batch, tm)
        nk = k_pad // tk

        need = (2 * tm * tk * 2 + 2 * tm * n_pad * 4 + tm * n_pad * 4
                + weight_bytes + n_pad * 4)
        vmem_limit = int(min(vmem_cap - (4 << 20), max(need + (8 << 20), 32 << 20)))

        if nk == 1:
            w_spec = _resident_spec((tk, n_pad), lambda m, k: (0, 0))
        else:
            w_spec = pl.BlockSpec((tk, n_pad), lambda m, k: (k, 0))
        b_spec = _resident_spec((1, n_pad), lambda m, k: (0, 0))

        out = pl.pallas_call(
            folded_mlp_kernel,
            out_shape=jax.ShapeDtypeStruct((batch, n_pad), jnp.float32),
            grid=(nm, nk),
            in_specs=[
                pl.BlockSpec((tm, tk), lambda m, k: (m, k)),   # batch/K-tiled activations
                w_spec,                                         # folded weight
                b_spec,                                         # folded bias
            ],
            out_specs=pl.BlockSpec((tm, n_pad), lambda m, k: (m, 0)),
            scratch_shapes=[pltpu.VMEM((tm, n_pad), jnp.float32)],
            compiler_params=pltpu.CompilerParams(
                dimension_semantics=("parallel", "arbitrary"),
                vmem_limit_bytes=vmem_limit,
            ),
        )(xb, w_kn, b_n)

        # Drop the lane padding and apply the .squeeze() from the PyTorch forward.
        return jnp.squeeze(out[:, :outsize])

    return forward


def init_linear(key, fan_in, fan_out):
    """Deterministic init mimicking nn.Linear's uniform(-1/sqrt(fan_in), 1/sqrt(fan_in)).
    Returned weight is already transposed to (fan_in, fan_out); bias is (1, fan_out)."""
    kw, kb = jax.random.split(key)
    bound = 1.0 / jnp.sqrt(fan_in)
    w = jax.random.uniform(kw, (fan_in, fan_out), jnp.float32, -bound, bound)
    b = jax.random.uniform(kb, (1, fan_out), jnp.float32, -bound, bound)
    return w, b


if __name__ == "__main__":
    insize, hiddensize, outsize = 16, 32, 1
    batch = 8

    key = jax.random.PRNGKey(0)
    kx, k1, k2, k3 = jax.random.split(key, 4)

    x = jax.random.normal(kx, (batch, insize), jnp.float32)
    w1, b1 = init_linear(k1, insize, hiddensize)
    w2, b2 = init_linear(k2, hiddensize, hiddensize)
    w3, b3 = init_linear(k3, hiddensize, outsize)

    forward = make_mlp_forward(w1, b1, w2, b2, w3, b3)   # fold happens once, here
    y = jax.block_until_ready(forward(x))

    # Pure-JAX f32 reference: the unfused 3-layer forward, as in the PyTorch module.
    ref = jnp.squeeze(((x @ w1 + b1) @ w2 + b2) @ w3 + b3)
    assert y.shape == ref.shape, (y.shape, ref.shape)
    # Tolerance accounts for bf16 MXU inputs (f32 accumulation) + f32 fold reassociation.
    max_err = float(jnp.max(jnp.abs(y - ref)))
    assert jnp.allclose(y, ref, atol=2e-2, rtol=2e-2), max_err

    print("KERNEL_OK")
</pallas_src>

<mosaic_0001>
module attributes {stable_mosaic.version = 11 : i64} {
  func.func @folded_mlp_kernel(%arg0: i32, %arg1: i32, %arg2: memref<8x16xbf16, #tpu.memory_space<vmem>>, %arg3: memref<16x128xbf16, #tpu.memory_space<vmem>>, %arg4: memref<1x128xf32, #tpu.memory_space<vmem>>, %arg5: memref<8x128xf32, #tpu.memory_space<vmem>>, %arg6: memref<8x128xf32, #tpu.memory_space<vmem>>) attributes {dimension_semantics = [#tpu.dimension_semantics<parallel>, #tpu.dimension_semantics<arbitrary>], iteration_bounds = array<i64: 1, 1>, scalar_prefetch = 0 : i64, scratch_operands = 1 : i64, tpu.core_type = #tpu.core_type<tc>, window_params = [{transform_indices = @transform_0, window_bounds = array<i64: 8, 16>}, {pipeline_mode = #tpu.pipeline_mode<synchronous>, transform_indices = @transform_1, window_bounds = array<i64: 16, 128>}, {pipeline_mode = #tpu.pipeline_mode<synchronous>, transform_indices = @transform_2, window_bounds = array<i64: 1, 128>}, {transform_indices = @transform_3, window_bounds = array<i64: 8, 128>}]} {
    %c0_i32 = arith.constant 0 : i32
    %0 = arith.cmpi eq, %arg1, %c0_i32 : i32
    %1 = arith.extui %0 : i1 to i32
    %c0_i32_0 = arith.constant 0 : i32
    %2 = arith.cmpi ne, %1, %c0_i32_0 : i32
    scf.if %2 {
      %cst_10 = arith.constant 0.000000e+00 : f32
      %12 = vector.broadcast %cst_10 : f32 to vector<8x128xf32>
      %c0_11 = arith.constant 0 : index
      %c0_12 = arith.constant 0 : index
      %13 = vector.load %arg6[%c0_11, %c0_12] : memref<8x128xf32, #tpu.memory_space<vmem>>, vector<8x128xf32>
      tpu.vector_store %arg6[%c0_11, %c0_12], %12 {strides = array<i32>} : memref<8x128xf32, #tpu.memory_space<vmem>>, vector<8x128xf32>,
    } else {
    }
    %c0 = arith.constant 0 : index
    %c0_1 = arith.constant 0 : index
    %3 = vector.load %arg6[%c0, %c0_1] : memref<8x128xf32, #tpu.memory_space<vmem>>, vector<8x128xf32>
    %c0_2 = arith.constant 0 : index
    %c0_3 = arith.constant 0 : index
    %4 = vector.load %arg2[%c0_2, %c0_3] : memref<8x16xbf16, #tpu.memory_space<vmem>>, vector<8x16xbf16>
    %c0_4 = arith.constant 0 : index
    %c0_5 = arith.constant 0 : index
    %5 = vector.load %arg3[%c0_4, %c0_5] : memref<16x128xbf16, #tpu.memory_space<vmem>>, vector<16x128xbf16>
    %cst = arith.constant dense<0.000000e+00> : vector<8x128xf32>
    %6 = tpu.matmul %4, %5, %cst {dimension_numbers = #tpu.dot_dimension_numbers<[1], [0], [0], [1], [0, 0, 1, 1], [], []>} : vector<8x16xbf16>, vector<16x128xbf16>, vector<8x128xf32> -> vector<8x128xf32>
    %7 = arith.addf %3, %6 : vector<8x128xf32>
    %c0_6 = arith.constant 0 : index
    %c0_7 = arith.constant 0 : index
    %8 = vector.load %arg6[%c0_6, %c0_7] : memref<8x128xf32, #tpu.memory_space<vmem>>, vector<8x128xf32>
    tpu.vector_store %arg6[%c0_6, %c0_7], %7 {strides = array<i32>} : memref<8x128xf32, #tpu.memory_space<vmem>>, vector<8x128xf32>,
    %c0_i32_8 = arith.constant 0 : i32
    %9 = arith.cmpi eq, %arg1, %c0_i32_8 : i32
    %10 = arith.extui %9 : i1 to i32
    %c0_i32_9 = arith.constant 0 : i32
    %11 = arith.cmpi ne, %10, %c0_i32_9 : i32
    scf.if %11 {
      %c0_10 = arith.constant 0 : index
      %c0_11 = arith.constant 0 : index
      %12 = vector.load %arg6[%c0_10, %c0_11] : memref<8x128xf32, #tpu.memory_space<vmem>>, vector<8x128xf32>
      %c0_12 = arith.constant 0 : index
      %c0_13 = arith.constant 0 : index
      %13 = vector.load %arg4[%c0_12, %c0_13] : memref<1x128xf32, #tpu.memory_space<vmem>>, vector<1x128xf32>
      %14 = vector.broadcast %13 : vector<1x128xf32> to vector<8x128xf32>
      %15 = arith.addf %12, %14 : vector<8x128xf32>
      %c0_14 = arith.constant 0 : index
      %c0_15 = arith.constant 0 : index
      %16 = vector.load %arg5[%c0_14, %c0_15] : memref<8x128xf32, #tpu.memory_space<vmem>>, vector<8x128xf32>
      tpu.vector_store %arg5[%c0_14, %c0_15], %15 {strides = array<i32>} : memref<8x128xf32, #tpu.memory_space<vmem>>, vector<8x128xf32>,
    } else {
    }
    return
  }
  func.func @transform_0(%arg0: i32, %arg1: i32) -> (i32, i32) {
    %c0_i32 = arith.constant 0 : i32
    return %arg0, %arg1 : i32, i32
  }
  func.func @transform_1(%arg0: i32, %arg1: i32) -> (i32, i32) {
    %c0_i32 = arith.constant 0 : i32
    %c0_i32_0 = arith.constant 0 : i32
    %c0_i32_1 = arith.constant 0 : i32
    return %c0_i32, %c0_i32_0 : i32, i32
  }
  func.func @transform_2(%arg0: i32, %arg1: i32) -> (i32, i32) {
    %c0_i32 = arith.constant 0 : i32
    %c0_i32_0 = arith.constant 0 : i32
    %c0_i32_1 = arith.constant 0 : i32
    return %c0_i32, %c0_i32_0 : i32, i32
  }
  func.func @transform_3(%arg0: i32, %arg1: i32) -> (i32, i32) {
    %c0_i32 = arith.constant 0 : i32
    %c0_i32_0 = arith.constant 0 : i32
    return %arg0, %c0_i32 : i32, i32
  }
}

</mosaic_0001>

<llo_original>
// kernel: forward.1
$region0: #{forward.1}
  #allocation0 [shape = 'u32[]', space=smem, size = 0x4, offset = 0x4, fixed_abs, tag = 'smem constant byte address 0x4 - core index']
  #allocation1 [shape = 'u32[72,128]{1,0:T(1,128)}', space=vmem, size = 0x9000, scoped, tag = 'internal scratch']
  #allocation2 [shape = 'f32[8,128]{1,0:T(8,128)}', space=vmem, size = 0x1000, scoped, tag = 'scratch operand']
  %s0 = inlined_call_operand.vmem [shape: bf16[8,16], index: 0, kind: input, shape index: {}]
  %s1 = inlined_call_operand.vmem [shape: bf16[16,128], index: 1, kind: input, shape index: {}]
  %s2 = inlined_call_operand.vmem [shape: f32[1,128], index: 2, kind: input, shape index: {}]
  %s3 = inlined_call_operand.vmem [shape: f32[8,128], index: 3, kind: output, shape index: {}]
  %s4 = sld [smem:[#allocation0]]
  $region30: #{forward.1} parent=0
    _
  %s6 = ssub.s32 1, %s4
  %s7 = scalar_select 0, %s6, %s4
  // Predicated region
  $region2: #{forward.1} parent=0 // pred_check
    _
  $region3: #{forward.1} parent=0 // pred_check_branch
    %9 = sbr.rel (0) target = $region5
  $region4: #{forward.1} parent=0 // pred_region
    _
  $region5: #{forward.1} parent=0 // pred_fallthru
    _
  // Predicated region
  $region6: #{forward.1} parent=0 // pred_check
    _
  $region7: #{forward.1} parent=0 // pred_check_branch
    %11 = sbr.rel (0) target = $region9
  $region8: #{forward.1} parent=0 // pred_region
    _
  $region9: #{forward.1} parent=0 // pred_fallthru
    _
  // Predicated region
  $region10: #{forward.1} parent=0 // pred_check
    _
  $region11: #{forward.1} parent=0 // pred_check_branch
    %13 = sbr.rel (0) target = $region13
  $region12: #{forward.1} parent=0 // pred_region
    _
  $region13: #{forward.1} parent=0 // pred_fallthru
    _
  %p15 = scmp.eq.s32.totalorder 0, 0
  // Predicated region
  $region14: #{forward.1} parent=0 // pred_check
    %p16 = pneg %p15
  $region15: #{forward.1} parent=0 // pred_check_branch
    %18 = sbr.rel (%p16) target = $region17
  $region16: #{forward.1} parent=0 // pred_region
    %19 = vst [vmem:[#allocation2] sm:$0xff] 0.0
  $region17: #{forward.1} parent=0 // pred_fallthru
    _
  %v20 = vld [vmem:[#allocation2] sm:$0xff]
  %v21 = vld [vmem:[%s0] sm:$0xf]
  %v22 = vld [vmem:[%s1] sm:$0xf]
  %v23 = vld [vmem:[%s1 + $0x4] sm:$0xf]
  %v26 = vunpack.c.l.b16 %v22
  %v27 = vunpack.c.l.b16 %v23
  %v28 = vpack.c.b16 %v27, %v26
  %vm30 = vcmask 130048
  %v32 = vsel %vm30, %v21, 0
  %34 = vmatpush.bf16.msra.mxu0 0
  %35 = vmatpush.bf16.msra.mxu0 0
  %36 = vmatpush.bf16.msra.mxu0 0
  %37 = vmatpush.bf16.msra.mxu0 0
  %38 = vmatpush.bf16.msra.mxu0 0
  %39 = vmatpush.bf16.msra.mxu0 0
  %40 = vmatpush.bf16.msra.mxu0 0
  %41 = vmatpush.bf16.msra.mxu0 %v28
  %42 = vmatmul.bf16.gmra.mxu0 %v32
  %v43 = vpop.f32.mrf.mxu0
  %v44 = vadd.f32 0.0, %v43
  %v45 = vpop.f32.mrf.mxu0
  %46 = vdwg.mxu0
  %v47 = vadd.f32 %v20, %v44
  %48 = vst [vmem:[#allocation2] sm:$0xff] %v47
  // Predicated region
  $region18: #{forward.1} parent=0 // pred_check
    %p49 = pneg %p15
  $region19: #{forward.1} parent=0 // pred_check_branch
    %51 = sbr.rel (%p49) target = $region21
  $region20: #{forward.1} parent=0 // pred_region
    %v52 = vld [vmem:[#allocation2] sm:$0xff]
    %v53 = vld [vmem:[%s2] sm:$0x1]
    %v55 = vperm.slane %v53, 0
    %v57 = vadd.f32 %v52, %v55
    %58 = vst [vmem:[%s3] sm:$0xff] %v57
  $region21: #{forward.1} parent=0 // pred_fallthru
    _
  // Predicated region
  $region22: #{forward.1} parent=0 // pred_check
    _
  $region23: #{forward.1} parent=0 // pred_check_branch
    %60 = sbr.rel (0) target = $region25
  $region24: #{forward.1} parent=0 // pred_region
    _
  $region25: #{forward.1} parent=0 // pred_fallthru
    _
  // Predicated region
  $region26: #{forward.1} parent=0 // pred_check
    _
  $region27: #{forward.1} parent=0 // pred_check_branch
    %62 = sbr.rel (0) target = $region29
  $region28: #{forward.1} parent=0 // pred_region
    _
  $region29: #{forward.1} parent=0 // pred_fallthru
    _

</llo_original>
